<compile_context>
chip_gen: v7x
topology: tpu7x:2x2x1
jax: 0.10.0
libtpu: 0.0.40
codegen_flags: <defaults>
</compile_context>

<pallas_src>
import jax
import jax.numpy as jnp
from jax.experimental import pallas as pl
from jax.experimental.pallas import tpu as pltpu


# Hard cap on rows per batch tile.  Activation + output buffers are lane-padded
# to 128, so double-buffered VMEM use at this cap is
#   2 * (tb*128*4 [x] + tb*128*4 [out]) ~= 16-17 MiB  -> safe on v5e/v6e/v7x.
_MAX_TILE_B = 8192
# Above this batch size we force grid_b >= 2 so both v7x TensorCores (and both
# HBM paths) get work; harmless single extra grid step on v5e/v6e.
_SPLIT_BATCH_THRESHOLD = 2048


def intent_classifier_kernel(x_ref, wt_ref, b_ref, o_ref):
    # x_ref:  [TB, D]   activation tile (streams over the batch grid axis)
    # wt_ref: [D, L]    weight, pre-transposed in the wrapper, VMEM-resident
    # b_ref:  [1, L]    bias row, VMEM-resident
    # o_ref:  [TB, L]   output tile
    y = jnp.dot(x_ref[...], wt_ref[...], preferred_element_type=jnp.float32)
    o_ref[...] = (y + b_ref[...].astype(jnp.float32)).astype(o_ref.dtype)


def _pick_batch_tile(B, tile_b):
    """Pick a batch tile: multiple of 8 (sublane) or the full batch, VMEM-capped,
    and split so grid_b >= 2 for large batches (v7x dual-TC sharding)."""
    tb = min(tile_b, _MAX_TILE_B, B)
    if tb != B:
        tb -= tb % 8
        if tb == 0:
            tb = B  # tiny batch: single full-extent block is always legal
    # If one tile would cover a large batch, split it so the "parallel" grid
    # axis has >= 2 steps and v7x's second TensorCore isn't idle.
    if tb == B and B >= _SPLIT_BATCH_THRESHOLD:
        half = (B // 2) // 8 * 8
        if half > 0:
            tb = half
    return tb


def intent_classifier(x, weight, bias, *, tile_b=2048):
    """x: [B, D], weight: [L, D] (PyTorch nn.Linear layout), bias: [L].

    dropout_rate=0.0 -> dropout is the identity, so only the linear layer runs.
    """
    B, D = x.shape
    L = weight.shape[0]

    # One-time wrapper-side transpose (L*D elements ~ 1.3 KB at module shapes):
    # the resident weight block then contracts on its major dim inside the
    # kernel, guaranteeing no per-grid-step layout change / vxpose.
    wt = jnp.transpose(weight)          # [D, L]
    b2 = bias.reshape(1, L)             # broadcast row, VMEM-resident

    tb = _pick_batch_tile(B, tile_b)
    grid_b = pl.cdiv(B, tb)

    out_dtype = x.dtype
    cost = pl.CostEstimate(
        flops=2 * B * D * L,
        transcendentals=0,
        bytes_accessed=(
            B * D * x.dtype.itemsize
            + L * D * weight.dtype.itemsize
            + L * bias.dtype.itemsize
            + B * L * jnp.dtype(out_dtype).itemsize
        ),
    )

    return pl.pallas_call(
        intent_classifier_kernel,
        out_shape=jax.ShapeDtypeStruct((B, L), out_dtype),
        grid_spec=pltpu.PrefetchScalarGridSpec(
            num_scalar_prefetch=0,
            grid=(grid_b,),
            in_specs=[
                pl.BlockSpec((tb, D), lambda i: (i, 0)),   # activations stream over B
                pl.BlockSpec((D, L), lambda i: (0, 0)),    # weight resident
                pl.BlockSpec((1, L), lambda i: (0, 0)),    # bias resident
            ],
            out_specs=pl.BlockSpec((tb, L), lambda i: (i, 0)),
        ),
        compiler_params=pltpu.CompilerParams(
            # Shards batch tiles across TensorCores on v7x; no-op on v5e/v6e.
            dimension_semantics=("parallel",),
            # Raise the scoped-VMEM budget so the 8192-row tile (~17 MiB
            # double-buffered after lane padding) also clears v5e's 16 MiB
            # default; actual allocation stays well below this on all gens.
            vmem_limit_bytes=64 << 20,
        ),
        cost_estimate=cost,
    )(x, wt, b2)


if __name__ == "__main__":
    # Small shapes consistent with the module: batch=8, input_dim=32, labels=10.
    batch, input_dim, num_intent_labels = 8, 32, 10

    key = jax.random.PRNGKey(0)
    kx, kw, kb = jax.random.split(key, 3)

    x = jax.random.normal(kx, (batch, input_dim), dtype=jnp.float32)

    # Deterministic parameter init mimicking nn.Linear: U(-1/sqrt(D), 1/sqrt(D)).
    bound = 1.0 / (input_dim ** 0.5)
    weight = jax.random.uniform(
        kw, (num_intent_labels, input_dim), dtype=jnp.float32,
        minval=-bound, maxval=bound)
    bias = jax.random.uniform(
        kb, (num_intent_labels,), dtype=jnp.float32,
        minval=-bound, maxval=bound)

    # dropout_rate=0.0 -> identity; nothing to apply before the linear layer.
    # TODO(synk): nonzero dropout_rate (training mode) would need an in-kernel
    # pltpu.prng_seed/prng_random_bits mask; eval-mode module needs none.
    out = intent_classifier(x, weight, bias)
    out = jax.block_until_ready(out)

    # Reference check (plain JAX) for sanity.
    ref = x @ weight.T + bias
    assert out.shape == (batch, num_intent_labels)
    assert jnp.allclose(out, ref, atol=1e-5, rtol=1e-5)

    print("KERNEL_OK")
</pallas_src>

<mosaic_0001>
module attributes {stable_mosaic.version = 11 : i64} {
  func.func @intent_classifier_kernel(%arg0: i32, %arg1: memref<8x32xf32, #tpu.memory_space<vmem>>, %arg2: memref<32x10xf32, #tpu.memory_space<vmem>>, %arg3: memref<1x10xf32, #tpu.memory_space<vmem>>, %arg4: memref<8x10xf32, #tpu.memory_space<vmem>>) attributes {dimension_semantics = [#tpu.dimension_semantics<parallel>], iteration_bounds = array<i64: 1>, scalar_prefetch = 0 : i64, scratch_operands = 0 : i64, tpu.core_type = #tpu.core_type<tc>, window_params = [{transform_indices = @transform_0, window_bounds = array<i64: 8, 32>}, {pipeline_mode = #tpu.pipeline_mode<synchronous>, transform_indices = @transform_1, window_bounds = array<i64: 32, 10>}, {pipeline_mode = #tpu.pipeline_mode<synchronous>, transform_indices = @transform_2, window_bounds = array<i64: 1, 10>}, {transform_indices = @transform_3, window_bounds = array<i64: 8, 10>}]} {
    %c0 = arith.constant 0 : index
    %c0_0 = arith.constant 0 : index
    %0 = vector.load %arg1[%c0, %c0_0] : memref<8x32xf32, #tpu.memory_space<vmem>>, vector<8x32xf32>
    %c0_1 = arith.constant 0 : index
    %c0_2 = arith.constant 0 : index
    %1 = vector.load %arg2[%c0_1, %c0_2] : memref<32x10xf32, #tpu.memory_space<vmem>>, vector<32x10xf32>
    %cst = arith.constant dense<0.000000e+00> : vector<8x10xf32>
    %2 = tpu.matmul %0, %1, %cst {dimension_numbers = #tpu.dot_dimension_numbers<[1], [0], [0], [1], [0, 0, 1, 1], [], []>} : vector<8x32xf32>, vector<32x10xf32>, vector<8x10xf32> -> vector<8x10xf32>
    %c0_3 = arith.constant 0 : index
    %c0_4 = arith.constant 0 : index
    %3 = vector.load %arg3[%c0_3, %c0_4] : memref<1x10xf32, #tpu.memory_space<vmem>>, vector<1x10xf32>
    %4 = vector.broadcast %3 : vector<1x10xf32> to vector<8x10xf32>
    %5 = arith.addf %2, %4 : vector<8x10xf32>
    %c0_5 = arith.constant 0 : index
    %c0_6 = arith.constant 0 : index
    %6 = vector.load %arg4[%c0_5, %c0_6] : memref<8x10xf32, #tpu.memory_space<vmem>>, vector<8x10xf32>
    tpu.vector_store %arg4[%c0_5, %c0_6], %5 {strides = array<i32>} : memref<8x10xf32, #tpu.memory_space<vmem>>, vector<8x10xf32>,
    return
  }
  func.func @transform_0(%arg0: i32) -> (i32, i32) {
    %c0_i32 = arith.constant 0 : i32
    %c0_i32_0 = arith.constant 0 : i32
    return %arg0, %c0_i32 : i32, i32
  }
  func.func @transform_1(%arg0: i32) -> (i32, i32) {
    %c0_i32 = arith.constant 0 : i32
    %c0_i32_0 = arith.constant 0 : i32
    %c0_i32_1 = arith.constant 0 : i32
    return %c0_i32, %c0_i32_0 : i32, i32
  }
  func.func @transform_2(%arg0: i32) -> (i32, i32) {
    %c0_i32 = arith.constant 0 : i32
    %c0_i32_0 = arith.constant 0 : i32
    %c0_i32_1 = arith.constant 0 : i32
    return %c0_i32, %c0_i32_0 : i32, i32
  }
  func.func @transform_3(%arg0: i32) -> (i32, i32) {
    %c0_i32 = arith.constant 0 : i32
    %c0_i32_0 = arith.constant 0 : i32
    return %arg0, %c0_i32 : i32, i32
  }
}

</mosaic_0001>

<llo_original>
// kernel: tpu_custom_call.1
$region0: #{tpu_custom_call.1}
  #allocation0 [shape = 'u32[]', space=smem, size = 0x4, offset = 0x4, fixed_abs, tag = 'smem constant byte address 0x4 - core index']
  #allocation1 [shape = 'u32[144,128]{1,0:T(1,128)}', space=vmem, size = 0x12000, scoped, tag = 'internal scratch']
  %s0 = inlined_call_operand.hbm [shape: f32[8,32], index: 0, kind: input, shape index: {}]
  %s1 = inlined_call_operand.hbm [shape: f32[32,10], index: 1, kind: input, shape index: {}]
  %s2 = inlined_call_operand.hbm [shape: f32[1,10], index: 2, kind: input, shape index: {}]
  %s3 = inlined_call_operand.hbm [shape: f32[8,10], index: 3, kind: output, shape index: {}]
  %s4 = sld [smem:[#allocation0]]
  $region34: #{tpu_custom_call.1} parent=0
    _
  %s6 = ssub.s32 1, %s4
  %s7 = scalar_select 0, %s6, %s4
  $region1: #{tpu_custom_call.1} parent=0
    #allocation2 [shape = 'u8[4096]{0}', space=vmem, size = 0x1000, scoped, tag = 'input window, operand 0, single buffered']
    #allocation3 [shape = 's32[1]{0}', space=sflag, size = 0x4, scoped, tag = 'scoped memory for tpu_custom_call.1']
    #allocation4 [shape = 's32[1]{0}', space=sflag, size = 0x4, scoped, tag = 'scoped memory for tpu_custom_call.1']
    #allocation5 [shape = 'u8[16384]{0}', space=vmem, size = 0x4000, scoped, tag = 'input window, operand 1, single buffered']
    #allocation6 [shape = 's32[1]{0}', space=sflag, size = 0x4, scoped, tag = 'scoped memory for tpu_custom_call.1']
    #allocation7 [shape = 'u8[512]{0}', space=vmem, size = 0x400, scoped, tag = 'input window, operand 2, single buffered']
    #allocation8 [shape = 'u8[4096]{0}', space=vmem, size = 0x1000, scoped, tag = 'output window, operand 0, single buffered']
    %8 = vsyncpa [#allocation3], 0
    %9 = vsyncpa [#allocation6], 0
    %10 = vsyncpa [#allocation4], 0
    // Predicated region
    $region2: #{tpu_custom_call.1} parent=1 // pred_check
      _
    $region3: #{tpu_custom_call.1} parent=1 // pred_check_branch
      %12 = sbr.rel (0) target = $region5
    $region4: #{tpu_custom_call.1} parent=1 // pred_region
      %s14 = ssub.s32 128, 128
      %15 = vsyncadd [#allocation3], %s14
      %s17 = sshll.u32 [#allocation2], 4
      %s18 = int_to_ptr.vmem [resolvable:$true] %s17
      %20 = dma.hbm_to_vmem [thread:$0]  %s0, 128, %s18, [#allocation3]
    $region5: #{tpu_custom_call.1} parent=1 // pred_fallthru
      _
    // Predicated region
    $region6: #{tpu_custom_call.1} parent=1 // pred_check
      _
    $region7: #{tpu_custom_call.1} parent=1 // pred_check_branch
      %22 = sbr.rel (0) target = $region9
    $region8: #{tpu_custom_call.1} parent=1 // pred_region
      %s24 = ssub.s32 512, 512
      %25 = vsyncadd [#allocation6], %s24
      %s26 = sshll.u32 [#allocation5], 4
      %s27 = int_to_ptr.vmem [resolvable:$true] %s26
      %32 = dma.hbm_to_vmem [thread:$0]  %s1, 512, %s27, [#allocation6], 128, 128, 8
    $region9: #{tpu_custom_call.1} parent=1 // pred_fallthru
      _
    // Predicated region
    $region10: #{tpu_custom_call.1} parent=1 // pred_check
      _
    $region11: #{tpu_custom_call.1} parent=1 // pred_check_branch
      %34 = sbr.rel (0) target = $region13
    $region12: #{tpu_custom_call.1} parent=1 // pred_region
      %s36 = ssub.s32 16, 16
      %37 = vsyncadd [#allocation6], %s36
      %s39 = sshll.u32 [#allocation7], 4
      %s40 = int_to_ptr.vmem [resolvable:$true] %s39
      %42 = dma.hbm_to_vmem [thread:$0]  %s2, 16, %s40, [#allocation6]
    $region13: #{tpu_custom_call.1} parent=1 // pred_fallthru
      _
    // Predicated region
    $region14: #{tpu_custom_call.1} parent=1 // pred_check
      _
    $region15: #{tpu_custom_call.1} parent=1 // pred_check_branch
      %44 = sbr.rel (0) target = $region17
    $region16: #{tpu_custom_call.1} parent=1 // pred_region
      %45 = dma.done [#allocation3], 128
    $region17: #{tpu_custom_call.1} parent=1 // pred_fallthru
      _
    // Predicated region
    $region18: #{tpu_custom_call.1} parent=1 // pred_check
      _
    $region19: #{tpu_custom_call.1} parent=1 // pred_check_branch
      %47 = sbr.rel (0) target = $region21
    $region20: #{tpu_custom_call.1} parent=1 // pred_region
      %48 = dma.done [#allocation6], 512
    $region21: #{tpu_custom_call.1} parent=1 // pred_fallthru
      _
    // Predicated region
    $region22: #{tpu_custom_call.1} parent=1 // pred_check
      _
    $region23: #{tpu_custom_call.1} parent=1 // pred_check_branch
      %50 = sbr.rel (0) target = $region25
    $region24: #{tpu_custom_call.1} parent=1 // pred_region
      %51 = dma.done [#allocation6], 16
    $region25: #{tpu_custom_call.1} parent=1 // pred_fallthru
      _
    %v52 = vld [vmem:[#allocation2] sm:$0xff]
    %v53 = vld [vmem:[#allocation5] sm:$0xff]
    %v54 = vld [vmem:[#allocation5 + $0x8] sm:$0xff]
    %v55 = vld [vmem:[#allocation5 + $0x10] sm:$0xff]
    %v56 = vld [vmem:[#allocation5 + $0x18] sm:$0xff]
    %v57 = vld [vmem:[#allocation7] sm:$0x1]
    %v59 = vlaneseq
    %v60 = vshrl.u32 %v59, 7
    %v61 = vsub.s32 0, %v60
    %v62 = vrot.slane %v57, %v61
    %vm64 = vcmask 261120
    %v66 = vsel %vm64, %v52, 0
    %68 = vmatprep.subr.mxu0 0.0
    %69 = vmatpush1.msra.mxu0 %v53
    %70 = vmatprep.subr.mxu0 0.0
    %71 = vmatpush1.msra.mxu0 %v54
    %72 = vmatprep.subr.mxu0 0.0
    %73 = vmatpush1.msra.mxu0 %v55
    %74 = vmatprep.subr.mxu0 0.0
    %75 = vmatpush1.msra.mxu0 %v56
    %76 = vmatprep.subr.mxu0 0.0
    %77 = vmatpush1.msra.mxu0 0.0
    %78 = vmatprep.subr.mxu0 0.0
    %79 = vmatpush1.msra.mxu0 0.0
    %80 = vmatprep.subr.mxu0 0.0
    %81 = vmatpush1.msra.mxu0 0.0
    %82 = vmatprep.subr.mxu0 0.0
    %83 = vmatpush1.msra.mxu0 0.0
    %84 = vmatprep.subr.mxu0 0.0
    %85 = vmatpush1.msra.mxu0 0.0
    %86 = vmatprep.subr.mxu0 0.0
    %87 = vmatpush1.msra.mxu0 0.0
    %88 = vmatprep.subr.mxu0 0.0
    %89 = vmatpush1.msra.mxu0 0.0
    %90 = vmatprep.subr.mxu0 0.0
    %91 = vmatpush1.msra.mxu0 0.0
    %92 = vmatprep.subr.mxu0 0.0
    %93 = vmatpush1.msra.mxu0 0.0
    %94 = vmatprep.subr.mxu0 0.0
    %95 = vmatpush1.msra.mxu0 0.0
    %96 = vmatprep.subr.mxu0 0.0
    %97 = vmatpush1.msra.mxu0 0.0
    %98 = vmatprep.subr.mxu0 0.0
    %99 = vmatpush1.msra.mxu0 0.0
    %100 = vmatprep.subr.mxu0 0.0
    %101 = vmatpush1.msra.mxu0 0.0
    %102 = vmatprep.subr.mxu0 0.0
    %103 = vmatpush1.msra.mxu0 0.0
    %104 = vmatprep.subr.mxu0 0.0
    %105 = vmatpush1.msra.mxu0 0.0
    %106 = vmatprep.subr.mxu0 0.0
    %107 = vmatpush1.msra.mxu0 0.0
    %108 = vmatprep.subr.mxu0 0.0
    %109 = vmatpush1.msra.mxu0 0.0
    %110 = vmatprep.subr.mxu0 0.0
    %111 = vmatpush1.msra.mxu0 0.0
    %112 = vmatprep.subr.mxu0 0.0
    %113 = vmatpush1.msra.mxu0 0.0
    %114 = vmatprep.subr.mxu0 0.0
    %115 = vmatpush1.msra.mxu0 0.0
    %116 = vmatprep.subr.mxu0 0.0
    %117 = vmatpush1.msra.mxu0 0.0
    %118 = vmatprep.subr.mxu0 0.0
    %119 = vmatpush1.msra.mxu0 0.0
    %120 = vmatprep.subr.mxu0 0.0
    %121 = vmatpush1.msra.mxu0 0.0
    %122 = vmatprep.subr.mxu0 0.0
    %123 = vmatpush1.msra.mxu0 0.0
    %124 = vmatprep.subr.mxu0 0.0
    %125 = vmatpush1.msra.mxu0 0.0
    %126 = vmatprep.subr.mxu0 0.0
    %127 = vmatpush1.msra.mxu0 0.0
    %128 = vmatprep.subr.mxu0 0.0
    %129 = vmatpush1.msra.mxu0 0.0
    %130 = vmatprep.subr.mxu0 0.0
    %131 = vmatpush1.msra.mxu0 0.0
    %132 = vmatprep.mubr.f32.mxu0 0.0
    %133 = vmatmul.mubr.f32.gmra.mrb[0].mxu0 %v66
    %v134 = vpop.f32.mrb[0].mxu0
    %v135 = vadd.f32 %v62, %v134
    %v136 = vpop.f32.mrb[0].mxu0
    %137 = vdwg.mxu0
    %vm138 = vcmask 80896
    %139 = vst.msk [vmem:[#allocation8] sm:$0xff] %vm138, %v135
    // Predicated region
    $region26: #{tpu_custom_call.1} parent=1 // pred_check
      _
    $region27: #{tpu_custom_call.1} parent=1 // pred_check_branch
      %141 = sbr.rel (0) target = $region29
    $region28: #{tpu_custom_call.1} parent=1 // pred_region
      %s143 = ssub.s32 128, 128
      %144 = vsyncadd [#allocation4], %s143
      %s146 = sshll.u32 [#allocation8], 4
      %s147 = int_to_ptr.vmem [resolvable:$true] %s146
      %149 = dma.vmem_to_hbm [thread:$0]  %s147, 128, %s3, [#allocation4]
    $region29: #{tpu_custom_call.1} parent=1 // pred_fallthru
      _
    // Predicated region
    $region30: #{tpu_custom_call.1} parent=1 // pred_check
      _
    $region31: #{tpu_custom_call.1} parent=1 // pred_check_branch
      %151 = sbr.rel (0) target = $region33
    $region32: #{tpu_custom_call.1} parent=1 // pred_region
      %152 = dma.done [#allocation4], 128
    $region33: #{tpu_custom_call.1} parent=1 // pred_fallthru
      _
    %153 = vsyncpa [#allocation3], 1
    %154 = vsyncpa [#allocation6], 1
    %155 = vsyncpa [#allocation4], 1

</llo_original>
